<compile_context>
chip_gen: v5e
topology: v5e:2x2
jax: 0.10.0
libtpu: 0.0.40
codegen_flags: <defaults>
</compile_context>

<pallas_src>
import functools

import numpy as np
import jax
import jax.numpy as jnp
from jax.experimental import pallas as pl
from jax.experimental.pallas import tpu as pltpu

_NEG_BIG = -1.0e30  # stand-in for -inf (cosine similarities are bounded)


def _loss_kernel(xn_ref, pos_ref, srow_ref, scol_ref, out_ref, *, inv_temp):
    """One row-tile of the contrastive loss: per-row CE terms (lse - pos)."""
    tq = pos_ref.shape[0]
    i = pl.program_id(0)
    start = pl.multiple_of(i * tq, tq)

    # LHS row tile, pre-scaled by 1/temperature (a (tq, D) multiply instead
    # of a (tq, B) one after the matmul; exact for power-of-two 1/T).
    scale = jnp.asarray(inv_temp, dtype=xn_ref.dtype)
    lhs = xn_ref[pl.ds(start, tq), :] * scale

    # Scaled similarity logits: (tq, B) = (xn_tile / T) @ xn.T
    # NT matmul on the MXU, low-precision operands, f32 accumulation.
    logits = jax.lax.dot_general(
        lhs, xn_ref[...], (((1,), (1,)), ((), ())),
        preferred_element_type=jnp.float32)

    # Negative mask: different subject id (tiny (tq,1) / (1,B) int32 inputs).
    negm = srow_ref[...] != scol_ref[...]                      # (tq, B) bool
    neg_l = jnp.where(negm, logits, _NEG_BIG)                  # single select

    # Logsumexp with the static bound m = 1/T: all logits are <= 1/T because
    # |cos| <= 1, so exp(x - m) cannot overflow and the masked sentinel
    # exp(-1e30 - m) underflows to exactly 0.  No per-tile max reduction.
    pos_l = pos_ref[...]                                       # (tq,1), already /T
    m = jnp.float32(inv_temp)
    sum_exp = jnp.exp(pos_l - m) + jnp.sum(jnp.exp(neg_l - m),
                                           axis=1, keepdims=True)
    out_ref[...] = (m + jnp.log(sum_exp)) - pos_l              # per-row CE term


def _build_aux(subject_cnt, emb_cnt_per_subj):
    """Static positive-pair indices (row-major order of the boolean positive
    mask of the PyTorch module) and per-row subject ids.  Pure numpy glue."""
    n, k = subject_cnt, emb_cnt_per_subj
    B = n * k
    pr_idx = np.zeros((B,), np.int32)
    pc_idx = np.zeros((B,), np.int32)
    for i in range(n):
        s = i * k
        for j in range(k - 1):            # block row 0, cols 1..k-1
            pr_idx[s + j] = s
            pc_idx[s + j] = s + 1 + j
        pr_idx[s + k - 1] = s + 1         # block entry (1, 1) -> self-sim
        pc_idx[s + k - 1] = s + 1
    subj = (np.arange(B, dtype=np.int32) // k).astype(np.int32)
    return pr_idx, pc_idx, subj


def _pick_row_tile(B, cap=256):
    # 256 matches the v6e/v7x 2x256x256 MXU height; pass row_tile=128 on v5e.
    for t in (256, 128, 64, 32, 16, 8):
        if t <= cap and B % t == 0:
            return t
    return B


def contrastive_loss_btw_subject(embeddings, subject_cnt, emb_cnt_per_subj,
                                 temperature=0.5, row_tile=None,
                                 matmul_dtype=jnp.bfloat16):
    B, D = embeddings.shape
    assert subject_cnt * emb_cnt_per_subj == B, "Batch size does not match"
    assert emb_cnt_per_subj >= 2

    inv_t = 1.0 / float(temperature)

    # ---- grid-invariant preprocessing (single fused XLA passes) -----------
    x = embeddings.astype(jnp.float32)
    norm = jnp.sqrt(jnp.sum(x * x, axis=1, keepdims=True))
    xn_f32 = x / jnp.maximum(norm, 1e-12)          # == F.normalize(dim=1)
    xn = xn_f32.astype(matmul_dtype)               # MXU operand (bf16 default)

    pr_idx, pc_idx, subj = _build_aux(subject_cnt, emb_cnt_per_subj)
    pos = jnp.sum(jnp.take(xn_f32, jnp.asarray(pr_idx), axis=0) *
                  jnp.take(xn_f32, jnp.asarray(pc_idx), axis=0),
                  axis=1, keepdims=True)
    pos_logits = (pos * inv_t).astype(jnp.float32)  # (B, 1), already / T
    srow = jnp.asarray(subj.reshape(B, 1))
    scol = jnp.asarray(subj.reshape(1, B))

    tq = row_tile if row_tile is not None else _pick_row_tile(B)
    assert B % tq == 0 and (tq % 8 == 0 or tq == B), "bad row tile"
    grid = (B // tq,)

    # VMEM budget sized to actual residency (xn constant block is the bulk).
    itemsize = jnp.dtype(matmul_dtype).itemsize
    vmem_bytes = int(2 * B * D * itemsize          # xn (2 pipeline buffers)
                     + 6 * tq * B * 4              # logits/mask/exp temporaries
                     + 2 * (2 * tq + B + tq) * 4   # pos / srow / scol / out
                     + (2 << 20))                  # headroom
    vmem_limit = int(min(max(vmem_bytes, 32 << 20), 128 << 20))

    kernel = functools.partial(_loss_kernel, inv_temp=inv_t)
    per_row = pl.pallas_call(
        kernel,
        out_shape=jax.ShapeDtypeStruct((B, 1), jnp.float32),
        grid=grid,
        in_specs=[
            pl.BlockSpec((B, D), lambda i: (0, 0)),     # normalized emb (bf16)
            pl.BlockSpec((tq, 1), lambda i: (i, 0)),    # positive logits
            pl.BlockSpec((tq, 1), lambda i: (i, 0)),    # subject id (rows)
            pl.BlockSpec((1, B), lambda i: (0, 0)),     # subject id (cols)
        ],
        out_specs=pl.BlockSpec((tq, 1), lambda i: (i, 0)),
        compiler_params=pltpu.CompilerParams(
            dimension_semantics=("parallel",),          # uses both v7x TCs
            vmem_limit_bytes=vmem_limit),
    )(xn, pos_logits, srow, scol)

    return jnp.sum(per_row) / B


def _reference_loss(embeddings, subject_cnt, emb_cnt_per_subj, temperature):
    """Pure JAX/numpy reproduction of the PyTorch forward for sanity check."""
    n, k = subject_cnt, emb_cnt_per_subj
    B = n * k
    xn = embeddings / jnp.maximum(
        jnp.linalg.norm(embeddings, axis=1, keepdims=True), 1e-12)
    sim = np.asarray(xn @ xn.T)

    pos_mask = np.zeros((B, B), bool)
    neg_mask = np.ones((B, B), bool)
    for i in range(n):
        s = i * k
        sub = np.zeros((k, k), bool)
        sub[0, :] = True
        sub[0, 0] = False
        sub[1, 1] = True
        pos_mask[s:s + k, s:s + k] = sub
        neg_mask[s:s + k, s:s + k] = False

    positives = sim[pos_mask].reshape(B, 1)
    negatives = sim[neg_mask].reshape(B, -1)
    logits = jnp.asarray(
        np.concatenate([positives, negatives], axis=1)) / temperature
    lse = jax.nn.logsumexp(logits, axis=1)
    return jnp.sum(lse - logits[:, 0]) / B


if __name__ == "__main__":
    subject_cnt = 8
    emb_cnt_per_subj = 4
    batch_size = subject_cnt * emb_cnt_per_subj   # 32
    hidden = 32
    temperature = 0.5

    key = jax.random.PRNGKey(0)
    embeddings = jax.random.normal(key, (batch_size, hidden), dtype=jnp.float32)

    # row_tile=8 -> 4 grid steps, exercising the tiled path.
    loss = contrastive_loss_btw_subject(embeddings, subject_cnt,
                                        emb_cnt_per_subj, temperature,
                                        row_tile=8)
    loss = jax.block_until_ready(loss)

    ref = _reference_loss(embeddings, subject_cnt, emb_cnt_per_subj,
                          temperature)
    # bf16 similarity matmul => ~1e-3-scale deviation from the f32 reference.
    assert abs(float(loss) - float(ref)) < 2e-2, (float(loss), float(ref))
    print("KERNEL_OK")
</pallas_src>

<mosaic_0001>
module attributes {stable_mosaic.version = 11 : i64} {
  func.func @_loss_kernel(%arg0: i32, %arg1: memref<32x32xbf16, #tpu.memory_space<vmem>>, %arg2: memref<8x1xf32, #tpu.memory_space<vmem>>, %arg3: memref<8x1xi32, #tpu.memory_space<vmem>>, %arg4: memref<1x32xi32, #tpu.memory_space<vmem>>, %arg5: memref<8x1xf32, #tpu.memory_space<vmem>>) attributes {dimension_semantics = [#tpu.dimension_semantics<parallel>], iteration_bounds = array<i64: 4>, scalar_prefetch = 0 : i64, scratch_operands = 0 : i64, tpu.core_type = #tpu.core_type<tc>, window_params = [{pipeline_mode = #tpu.pipeline_mode<synchronous>, transform_indices = @transform_0, window_bounds = array<i64: 32, 32>}, {transform_indices = @transform_1, window_bounds = array<i64: 8, 1>}, {transform_indices = @transform_2, window_bounds = array<i64: 8, 1>}, {pipeline_mode = #tpu.pipeline_mode<synchronous>, transform_indices = @transform_3, window_bounds = array<i64: 1, 32>}, {transform_indices = @transform_4, window_bounds = array<i64: 8, 1>}]} {
    %c8_i32 = arith.constant 8 : i32
    %0 = arith.muli %arg0, %c8_i32 : i32
    %1 = tpu.assume_multiple %0, 8 : i32
    %2 = arith.index_cast %1 : i32 to index
    %c0 = arith.constant 0 : index
    %3 = vector.load %arg1[%2, %c0] : memref<32x32xbf16, #tpu.memory_space<vmem>>, vector<8x32xbf16>
    %cst = arith.constant 2.000000e+00 : bf16
    %4 = vector.broadcast %cst : bf16 to vector<8x32xbf16>
    %5 = arith.mulf %3, %4 : vector<8x32xbf16>
    %c0_0 = arith.constant 0 : index
    %c0_1 = arith.constant 0 : index
    %6 = vector.load %arg1[%c0_0, %c0_1] : memref<32x32xbf16, #tpu.memory_space<vmem>>, vector<32x32xbf16>
    %cst_2 = arith.constant dense<0.000000e+00> : vector<8x32xf32>
    %7 = tpu.matmul %5, %6, %cst_2 {dimension_numbers = #tpu.dot_dimension_numbers<[1], [1], [0], [0], [0, 0, 1, 0], [], []>} : vector<8x32xbf16>, vector<32x32xbf16>, vector<8x32xf32> -> vector<8x32xf32>
    %c0_3 = arith.constant 0 : index
    %c0_4 = arith.constant 0 : index
    %8 = vector.load %arg3[%c0_3, %c0_4] : memref<8x1xi32, #tpu.memory_space<vmem>>, vector<8x1xi32>
    %c0_5 = arith.constant 0 : index
    %c0_6 = arith.constant 0 : index
    %9 = vector.load %arg4[%c0_5, %c0_6] : memref<1x32xi32, #tpu.memory_space<vmem>>, vector<1x32xi32>
    %10 = vector.broadcast %8 : vector<8x1xi32> to vector<8x32xi32>
    %11 = vector.broadcast %9 : vector<1x32xi32> to vector<8x32xi32>
    %12 = arith.cmpi ne, %10, %11 : vector<8x32xi32>
    %cst_7 = arith.constant -1.000000e+30 : f32
    %13 = vector.broadcast %cst_7 : f32 to vector<8x32xf32>
    %14 = arith.select %12, %7, %13 : vector<8x32xi1>, vector<8x32xf32>
    %c0_8 = arith.constant 0 : index
    %c0_9 = arith.constant 0 : index
    %15 = vector.load %arg2[%c0_8, %c0_9] : memref<8x1xf32, #tpu.memory_space<vmem>>, vector<8x1xf32>
    %cst_10 = arith.constant 2.000000e+00 : f32
    %16 = vector.broadcast %cst_10 : f32 to vector<8x1xf32>
    %17 = arith.subf %15, %16 : vector<8x1xf32>
    %18 = math.exp %17 : vector<8x1xf32>
    %cst_11 = arith.constant 2.000000e+00 : f32
    %19 = vector.broadcast %cst_11 : f32 to vector<8x32xf32>
    %20 = arith.subf %14, %19 : vector<8x32xf32>
    %21 = math.exp %20 : vector<8x32xf32>
    %cst_12 = arith.constant dense<0.000000e+00> : vector<8xf32>
    %22 = vector.multi_reduction <add>, %21, %cst_12 [1] : vector<8x32xf32> to vector<8xf32>
    %23 = vector.shape_cast %22 : vector<8xf32> to vector<8x1xf32>
    %24 = arith.addf %18, %23 : vector<8x1xf32>
    %25 = math.log %24 : vector<8x1xf32>
    %cst_13 = arith.constant 2.000000e+00 : f32
    %26 = vector.broadcast %cst_13 : f32 to vector<8x1xf32>
    %27 = arith.addf %26, %25 : vector<8x1xf32>
    %28 = arith.subf %27, %15 : vector<8x1xf32>
    %c0_14 = arith.constant 0 : index
    %c0_15 = arith.constant 0 : index
    %29 = vector.load %arg5[%c0_14, %c0_15] : memref<8x1xf32, #tpu.memory_space<vmem>>, vector<8x1xf32>
    tpu.vector_store %arg5[%c0_14, %c0_15], %28 {strides = array<i32>} : memref<8x1xf32, #tpu.memory_space<vmem>>, vector<8x1xf32>,
    return
  }
  func.func @transform_0(%arg0: i32) -> (i32, i32) {
    %c0_i32 = arith.constant 0 : i32
    %c0_i32_0 = arith.constant 0 : i32
    %c0_i32_1 = arith.constant 0 : i32
    return %c0_i32, %c0_i32_0 : i32, i32
  }
  func.func @transform_1(%arg0: i32) -> (i32, i32) {
    %c0_i32 = arith.constant 0 : i32
    %c0_i32_0 = arith.constant 0 : i32
    return %arg0, %c0_i32 : i32, i32
  }
  func.func @transform_2(%arg0: i32) -> (i32, i32) {
    %c0_i32 = arith.constant 0 : i32
    %c0_i32_0 = arith.constant 0 : i32
    return %arg0, %c0_i32 : i32, i32
  }
  func.func @transform_3(%arg0: i32) -> (i32, i32) {
    %c0_i32 = arith.constant 0 : i32
    %c0_i32_0 = arith.constant 0 : i32
    %c0_i32_1 = arith.constant 0 : i32
    return %c0_i32, %c0_i32_0 : i32, i32
  }
  func.func @transform_4(%arg0: i32) -> (i32, i32) {
    %c0_i32 = arith.constant 0 : i32
    %c0_i32_0 = arith.constant 0 : i32
    return %arg0, %c0_i32 : i32, i32
  }
}

</mosaic_0001>

<llo_original>
// kernel: tpu_custom_call.1
$region0: #{tpu_custom_call.1}
  #allocation0 [shape = 'u32[]', space=smem, size = 0x4, offset = 0x4, fixed_abs, tag = 'smem constant byte address 0x4 - core index']
  #allocation1 [shape = 'u32[72,128]{1,0:T(1,128)}', space=vmem, size = 0x9000, scoped, tag = 'internal scratch']
  %s0 = inlined_call_operand.vmem [shape: bf16[32,32], index: 0, kind: input, shape index: {}]
  %s1 = inlined_call_operand.vmem [shape: f32[32,1], index: 1, kind: input, shape index: {}]
  %s2 = inlined_call_operand.vmem [shape: s32[32,1], index: 2, kind: input, shape index: {}]
  %s3 = inlined_call_operand.vmem [shape: s32[1,32], index: 3, kind: input, shape index: {}]
  %s4 = inlined_call_operand.vmem [shape: f32[32,1], index: 4, kind: output, shape index: {}]
  %s5 = sld [smem:[#allocation0]]
  $region49: #{tpu_custom_call.1} parent=0
    _
  %s7 = ssub.s32 1, %s5
  %s8 = scalar_select 0, %s7, %s5
  loop: start=0, step=1, limit=6
  $region2: #{tpu_custom_call.1} parent=0 // loop_pre_header
    _
  $region3: #{tpu_custom_call.1} parent=0 // loop_header
    %s10 = sphi 0, %s14
    %p11 = scmp.ge.s32.totalorder %s10, 6
    %s18 = sphi 0, %s18
    %s20 = sphi 0, %s18
    %s21 = sphi 0, %s20
    %s35 = sphi 0, %s21
    %s41 = sphi 0, %s43
    %s44 = sphi 0, %s41
    %s45 = sphi 0, %s44
    %s61 = sphi 0, %s45
    %s67 = sphi 0, %s69
    %s70 = sphi 0, %s67
    %s71 = sphi 0, %s70
    %s87 = sphi 0, %s71
    %s91 = sphi 0, %s91
    %s93 = sphi 0, %s91
    %s94 = sphi 0, %s93
    %s108 = sphi 0, %s94
    %s114 = sphi 0, %s116
    %s117 = sphi 0, %s114
    %s118 = sphi 0, %s117
    %s134 = sphi 0, %s118
  $region4: #{tpu_custom_call.1} parent=0 // loop_header_branch
    %13 = sbr.rel (%p11) target = $region8
  $region5: #{tpu_custom_call.1} parent=0 // loop_body
    %s15 = ssub.s32 %s10, 1
    %s16 = ssub.s32 %s10, 2
    %s17 = sadd.s32 %s10, 1
    %s19 = sadd.s32 %s18, 1
    %p22 = scmp.eq.s32.totalorder %s10, 3
    %p23 = scmp.ne.s32.totalorder %s18, %s20
    %p24 = scmp.eq.s32.totalorder %s10, 0
    %p25 = por %p23, %p24
    %p26 = scmp.ne.s32.totalorder %s18, %s20
    %p27 = scmp.eq.s32.totalorder %s15, 3
    %p28 = por %p26, %p27
    %p29 = scmp.ne.s32.totalorder %s20, %s21
    %p30 = scmp.eq.s32.totalorder %s15, 0
    %p31 = por %p29, %p30
    %p32 = scmp.ne.s32.totalorder %s20, %s21
    %p33 = scmp.eq.s32.totalorder %s16, 3
    %p34 = por %p32, %p33
    %p36 = scmp.ne.s32.totalorder %s21, %s35
    %p37 = scmp.eq.s32.totalorder %s16, 0
    %p38 = por %p36, %p37
    %s39 = ssub.s32 %s10, %s17
    %p40 = scmp.eq.s32.totalorder %s39, 0
    %s42 = sadd.s32 %s41, 1
    %s43 = scalar_select %p40, %s41, %s42
    %p46 = pneg %p40
    %p47 = scmp.eq.s32.totalorder %s10, 3
    %p48 = por %p46, %p47
    %p49 = scmp.ne.s32.totalorder %s41, %s44
    %p50 = scmp.eq.s32.totalorder %s10, 0
    %p51 = por %p49, %p50
    %p52 = scmp.ne.s32.totalorder %s41, %s44
    %p53 = scmp.eq.s32.totalorder %s15, 3
    %p54 = por %p52, %p53
    %p55 = scmp.ne.s32.totalorder %s44, %s45
    %p56 = scmp.eq.s32.totalorder %s15, 0
    %p57 = por %p55, %p56
    %p58 = scmp.ne.s32.totalorder %s44, %s45
    %p59 = scmp.eq.s32.totalorder %s16, 3
    %p60 = por %p58, %p59
    %p62 = scmp.ne.s32.totalorder %s45, %s61
    %p63 = scmp.eq.s32.totalorder %s16, 0
    %p64 = por %p62, %p63
    %s65 = ssub.s32 %s10, %s17
    %p66 = scmp.eq.s32.totalorder %s65, 0
    %s68 = sadd.s32 %s67, 1
    %s69 = scalar_select %p66, %s67, %s68
    %p72 = pneg %p66
    %p73 = scmp.eq.s32.totalorder %s10, 3
    %p74 = por %p72, %p73
    %p75 = scmp.ne.s32.totalorder %s67, %s70
    %p76 = scmp.eq.s32.totalorder %s10, 0
    %p77 = por %p75, %p76
    %p78 = scmp.ne.s32.totalorder %s67, %s70
    %p79 = scmp.eq.s32.totalorder %s15, 3
    %p80 = por %p78, %p79
    %p81 = scmp.ne.s32.totalorder %s70, %s71
    %p82 = scmp.eq.s32.totalorder %s15, 0
    %p83 = por %p81, %p82
    %p84 = scmp.ne.s32.totalorder %s70, %s71
    %p85 = scmp.eq.s32.totalorder %s16, 3
    %p86 = por %p84, %p85
    %p88 = scmp.ne.s32.totalorder %s71, %s87
    %p89 = scmp.eq.s32.totalorder %s16, 0
    %p90 = por %p88, %p89
    %s92 = sadd.s32 %s91, 1
    %p95 = scmp.eq.s32.totalorder %s10, 3
    %p96 = scmp.ne.s32.totalorder %s91, %s93
    %p97 = scmp.eq.s32.totalorder %s10, 0
    %p98 = por %p96, %p97
    %p99 = scmp.ne.s32.totalorder %s91, %s93
    %p100 = scmp.eq.s32.totalorder %s15, 3
    %p101 = por %p99, %p100
    %p102 = scmp.ne.s32.totalorder %s93, %s94
    %p103 = scmp.eq.s32.totalorder %s15, 0
    %p104 = por %p102, %p103
    %p105 = scmp.ne.s32.totalorder %s93, %s94
    %p106 = scmp.eq.s32.totalorder %s16, 3
    %p107 = por %p105, %p106
    %p109 = scmp.ne.s32.totalorder %s94, %s108
    %p110 = scmp.eq.s32.totalorder %s16, 0
    %p111 = por %p109, %p110
    %s112 = ssub.s32 %s10, %s17
    %p113 = scmp.eq.s32.totalorder %s112, 0
    %s115 = sadd.s32 %s114, 1
    %s116 = scalar_select %p113, %s114, %s115
    %p119 = pneg %p113
    %p120 = scmp.eq.s32.totalorder %s10, 3
    %p121 = por %p119, %p120
    %p122 = scmp.ne.s32.totalorder %s114, %s117
    %p123 = scmp.eq.s32.totalorder %s10, 0
    %p124 = por %p122, %p123
    %p125 = scmp.ne.s32.totalorder %s114, %s117
    %p126 = scmp.eq.s32.totalorder %s15, 3
    %p127 = por %p125, %p126
    %p128 = scmp.ne.s32.totalorder %s117, %s118
    %p129 = scmp.eq.s32.totalorder %s15, 0
    %p130 = por %p128, %p129
    %p131 = scmp.ne.s32.totalorder %s117, %s118
    %p132 = scmp.eq.s32.totalorder %s16, 3
    %p133 = por %p131, %p132
    %p135 = scmp.ne.s32.totalorder %s118, %s134
    %p136 = scmp.eq.s32.totalorder %s16, 0
    %p137 = por %p135, %p136
    %p138 = scmp.le.s32.totalorder 1, %s10
    %p139 = scmp.lt.s32.totalorder %s10, 5
    %p140 = pnand %p138, %p139
    %p141 = pneg %p140
    // Predicated region
    $region9: #{tpu_custom_call.1} parent=5 // pred_check
      _
    $region10: #{tpu_custom_call.1} parent=5 // pred_check_branch
      %143 = sbr.rel (%p140) target = $region12
    $region11: #{tpu_custom_call.1} parent=5 // pred_region
      %s144 = ssub.s32 %s10, 1
      // Predicated region
      $region13: #{tpu_custom_call.1} parent=11 // pred_check
        %p145 = pneg %p31
      $region14: #{tpu_custom_call.1} parent=11 // pred_check_branch
        %147 = sbr.rel (%p145) target = $region16
      $region15: #{tpu_custom_call.1} parent=11 // pred_region
        _
      $region16: #{tpu_custom_call.1} parent=11 // pred_fallthru
        _
      // Predicated region
      $region17: #{tpu_custom_call.1} parent=11 // pred_check
        %p148 = pneg %p104
      $region18: #{tpu_custom_call.1} parent=11 // pred_check_branch
        %150 = sbr.rel (%p148) target = $region20
      $region19: #{tpu_custom_call.1} parent=11 // pred_region
        _
      $region20: #{tpu_custom_call.1} parent=11 // pred_fallthru
        _
    $region12: #{tpu_custom_call.1} parent=5 // pred_fallthru
      _
    %p151 = scmp.lt.s32.totalorder %s10, 4
    // Predicated region
    $region21: #{tpu_custom_call.1} parent=5 // pred_check
      %p152 = pneg %p151
    $region22: #{tpu_custom_call.1} parent=5 // pred_check_branch
      %154 = sbr.rel (%p152) target = $region24
    $region23: #{tpu_custom_call.1} parent=5 // pred_region
      // Predicated region
      $region25: #{tpu_custom_call.1} parent=23 // pred_check
        %p155 = pneg %p51
      $region26: #{tpu_custom_call.1} parent=23 // pred_check_branch
        %157 = sbr.rel (%p155) target = $region28
      $region27: #{tpu_custom_call.1} parent=23 // pred_region
        %p158 = scmp.lt.s32.totalorder %s10, 3
        %s159 = scalar_select %p158, %s10, 3
        %s160 = smul.addr %s159, 8
        %s161 = scalar_lea.vmem %s1, %s160
      $region28: #{tpu_custom_call.1} parent=23 // pred_fallthru
        _
      // Predicated region
      $region29: #{tpu_custom_call.1} parent=23 // pred_check
        %p162 = pneg %p77
      $region30: #{tpu_custom_call.1} parent=23 // pred_check_branch
        %164 = sbr.rel (%p162) target = $region32
      $region31: #{tpu_custom_call.1} parent=23 // pred_region
        %p165 = scmp.lt.s32.totalorder %s10, 3
        %s166 = scalar_select %p165, %s10, 3
        %s167 = smul.addr %s166, 8
        %s168 = scalar_lea.vmem %s2, %s167
      $region32: #{tpu_custom_call.1} parent=23 // pred_fallthru
        _
    $region24: #{tpu_custom_call.1} parent=5 // pred_fallthru
      _
    %p169 = scmp.le.s32.totalorder 1, %s10
    %p170 = scmp.lt.s32.totalorder %s10, 5
    %p171 = pnand %p169, %p170
    %p172 = pneg %p171
    // Predicated region
    $region33: #{tpu_custom_call.1} parent=5 // pred_check
      _
    $region34: #{tpu_custom_call.1} parent=5 // pred_check_branch
      %174 = sbr.rel (%p171) target = $region36
    $region35: #{tpu_custom_call.1} parent=5 // pred_region
      %s175 = ssub.s32 %s10, 1
      %p176 = pneg %p31
      %p177 = pneg %p28
      %p178 = scmp.lt.s32.totalorder %s15, 3
      %s179 = scalar_select %p178, %s15, 3
      %s180 = smul.addr %s179, 8
      %s181 = scalar_lea.vmem %s1, %s180
      %p182 = pneg %p57
      %p183 = pneg %p54
      %p184 = scmp.lt.s32.totalorder %s15, 3
      %s185 = scalar_select %p184, %s15, 3
      %s186 = smul.addr %s185, 8
      %s187 = scalar_lea.vmem %s2, %s186
      %p188 = pneg %p83
      %p189 = pneg %p80
      %p190 = pneg %p104
      %p191 = pneg %p101
      %p192 = pneg %p130
      %p193 = pneg %p127
      %p194 = scmp.lt.s32.totalorder %s15, 3
      %s195 = scalar_select %p194, %s15, 3
      %s196 = smul.addr %s195, 8
      %s197 = scalar_lea.vmem %s4, %s196
      %p198 = scmp.lt.s32.totalorder %s15, 3
      %s199 = scalar_select %p198, %s15, 3
      %s200 = smul.addr %s199, 8
      %s201 = scalar_lea.vmem %s1, %s200
      %p202 = scmp.lt.s32.totalorder %s15, 3
      %s203 = scalar_select %p202, %s15, 3
      %s204 = smul.addr %s203, 8
      %s205 = scalar_lea.vmem %s2, %s204
      %p206 = scmp.lt.s32.totalorder %s15, 3
      %s207 = scalar_select %p206, %s15, 3
      %s208 = smul.addr %s207, 8
      %s209 = scalar_lea.vmem %s4, %s208
      %s211 = smul.u32 %s15, 8
      %s212 = sshra.s32 %s211, 3
      %s213 = sand.u32 %s211, 7
      %s214 = smul.addr %s212, 4
      %s215 = scalar_lea.vmem %s0, %s214
      %v216 = vld [vmem:[%s215] sm:$0xf]
      %v217 = vunpack.c.l.bf16 %v216
      %v218 = vmul.f32 %v217, 2.0
      %v219 = vpack.c.bf16 %v218, %v218
      %v220 = vld [vmem:[%s0] sm:$0xf]
      %v221 = vld [vmem:[%s0 + $0x4] sm:$0xf]
      %v222 = vld [vmem:[%s0 + $0x8] sm:$0xf]
      %v223 = vld [vmem:[%s0 + $0xc] sm:$0xf]
      %v228 = vunpack.c.l.b16 %v220
      %v229 = vunpack.c.l.b16 %v221
      %v230 = vunpack.c.l.b16 %v222
      %v231 = vunpack.c.l.b16 %v223
      %v232 = vpack.c.b16 %v229, %v228
      %v233 = vpack.c.b16 %v231, %v230
      %vm234 = vcmask 261120
      %v236 = vsel %vm234, %v219, 0
      %v239 = vsel %vm234, %v232, 0
      %v242 = vsel %vm234, %v233, 0
      %244 = vmatpush.bf16.xpose.msra.mxu0 0
      %245 = vmatpush.bf16.xpose.msra.mxu0 0
      %246 = vmatpush.bf16.xpose.msra.mxu0 0
      %247 = vmatpush.bf16.xpose.msra.mxu0 0
      %248 = vmatpush.bf16.xpose.msra.mxu0 0
      %249 = vmatpush.bf16.xpose.msra.mxu0 0
      %250 = vmatpush.bf16.xpose.msra.mxu0 %v242
      %251 = vmatpush.bf16.xpose.msra.mxu0 %v239
      %252 = vmatmul.bf16.gmra.mxu0 %v236
      %v253 = vpop.f32.mrf.mxu0
      %v254 = vadd.f32 0.0, %v253
      %v255 = vpop.f32.mrf.mxu0
      %256 = vdwg.mxu0
      %v257 = vld [vmem:[%s205] sm:$0xff]
      %v258 = vld [vmem:[%s3] sm:$0x1]
      %259 = vset.pattern.permute.xlu0 0
      %260 = vperm.xlu0 %259, %v257
      %v261 = vpop.permute.xlu0 %260
      %v262 = vperm.slane %v258, 0
      %vm263 = vcmp.ne.s32.totalorder %v261, %v262
      %v264 = vsel %vm263, %v254, -1e+30
      %v265 = vld [vmem:[%s201] sm:$0xff]
      %v266 = vsub.f32 %v265, 2.0
      %v267 = vmul.f32 %v266, 1.442695
      %v268 = vpow.pop %v267
      %v269 = vsub.f32 %v264, 2.0
      %v270 = vmul.f32 %v269, 1.442695
      %v271 = vpow.pop %v270
      %v272 = vsel %vm234, %v271, 0.0
      %273 = vadd.xlane.f32.xlu0 %v272
      %v274 = vpop.xlane.xlu0 %273
      %v275 = vadd.f32 %v268, %v274
      %v276 = vlog2.pop %v275
      %v277 = vmul.f32 %v276, 0.6931472
      %v278 = vadd.f32 %v277, 2.0
      %v279 = vsub.f32 %v278, %v265
      %vm280 = vcmask 7168
      %281 = vst.msk [vmem:[%s209] sm:$0xff] %vm280, %v279
      %p282 = scmp.lt.s32.totalorder %s15, 3
      %s283 = scalar_select %p282, %s15, 3
      %s284 = smul.addr %s283, 8
      %s285 = scalar_lea.vmem %s4, %s284
      // Predicated region
      $region37: #{tpu_custom_call.1} parent=35 // pred_check
        %p286 = pneg %p127
      $region38: #{tpu_custom_call.1} parent=35 // pred_check_branch
        %288 = sbr.rel (%p286) target = $region40
      $region39: #{tpu_custom_call.1} parent=35 // pred_region
        _
      $region40: #{tpu_custom_call.1} parent=35 // pred_fallthru
        _
    $region36: #{tpu_custom_call.1} parent=5 // pred_fallthru
      _
    %p289 = scmp.le.s32.totalorder 2, %s10
    // Predicated region
    $region41: #{tpu_custom_call.1} parent=5 // pred_check
      %p290 = pneg %p289
    $region42: #{tpu_custom_call.1} parent=5 // pred_check_branch
      %292 = sbr.rel (%p290) target = $region44
    $region43: #{tpu_custom_call.1} parent=5 // pred_region
      %s293 = ssub.s32 %s10, 2
      // Predicated region
      $region45: #{tpu_custom_call.1} parent=43 // pred_check
        %p294 = pneg %p133
      $region46: #{tpu_custom_call.1} parent=43 // pred_check_branch
        %296 = sbr.rel (%p294) target = $region48
      $region47: #{tpu_custom_call.1} parent=43 // pred_region
        %p297 = scmp.lt.s32.totalorder %s16, 3
        %s298 = scalar_select %p297, %s16, 3
        %s299 = smul.addr %s298, 8
        %s300 = scalar_lea.vmem %s4, %s299
      $region48: #{tpu_custom_call.1} parent=43 // pred_fallthru
        _
    $region44: #{tpu_custom_call.1} parent=5 // pred_fallthru
      _
  $region6: #{tpu_custom_call.1} parent=0 // loop_footer
    %s14 = sadd.s32 1, %s10
  $region7: #{tpu_custom_call.1} parent=0 // loop_footer_branch
    %9 = sbr.rel target = $region3
  $region8: #{tpu_custom_call.1} parent=0 // loop_exit
    _

</llo_original>
